<compile_context>
chip_gen: v7x
topology: tpu7x:2x2x1
jax: 0.10.0
libtpu: 0.0.40
codegen_flags: <defaults>
</compile_context>

<pallas_src>
import functools

import jax
import jax.numpy as jnp
from jax.experimental import pallas as pl
from jax.experimental.pallas import tpu as pltpu


def _cut_loss_kernel(pred_ref, adj_ref, out_ref,
                     probs_f32_ref, probs_bf16_ref, acc_ref, *, row_tile):
    # pred_ref     : (1, V, C)   logits for one batch element (f32), resident per batch
    # adj_ref      : (1, TV, V)  adjacency row-tile (int8 or bf16, 0/1 edges)
    # out_ref      : (1, 1, C)   per-batch partial sums over the color axis
    # probs_f32_ref: (V, C)      VMEM scratch, exact softmax probs
    # probs_bf16_ref:(V, C)      VMEM scratch, bf16 copy -> MXU RHS (no per-tile cast)
    # acc_ref      : (TV, C)     VMEM scratch, elementwise f32 partial accumulator
    i = pl.program_id(1)

    @pl.when(i == 0)
    def _init():
        # Softmax over the color axis, computed once per batch element (exact divide:
        # it runs once per batch, so the EUP-approx reciprocal buys nothing here).
        logits = pred_ref[0]                                      # (V, C) f32
        m = jnp.max(logits, axis=-1, keepdims=True)
        e = jnp.exp(logits - m)
        p = e / jnp.sum(e, axis=-1, keepdims=True)
        probs_f32_ref[...] = p
        probs_bf16_ref[...] = p.astype(jnp.bfloat16)
        acc_ref[...] = jnp.zeros_like(acc_ref)

    # 0/1 adjacency: int8 (or bf16) -> bf16, then a native bf16 x bf16 -> f32 MXU
    # matmul.  (TV, V) @ (V, C), contraction depth K = V.
    adj_tile = adj_ref[0].astype(jnp.bfloat16)                    # (TV, V)
    ap = jnp.dot(adj_tile, probs_bf16_ref[...],
                 preferred_element_type=jnp.float32)              # (TV, C) f32

    # Rows of the exact f32 probs matching this adjacency row-tile.
    row0 = pl.multiple_of(i * row_tile, row_tile)
    probs_rows = probs_f32_ref[pl.ds(row0, row_tile), :]          # (TV, C) f32

    # Pure VALU elementwise accumulate; no cross-lane/sublane reduce in the loop.
    acc_ref[...] += probs_rows * ap

    @pl.when(i == pl.num_programs(1) - 1)
    def _finalize():
        # One sublane reduce per batch element; lane reduce + batch mean done in JAX.
        out_ref[...] = jnp.sum(acc_ref[...], axis=0)[None, None, :]


def _vmem_capacity_bytes():
    """Per-core VMEM capacity; conservative (v7x) fallback if the query fails."""
    try:
        cap = getattr(pltpu.get_tpu_info(), "vmem_capacity_bytes", None)
        if cap:
            return int(cap)
    except Exception:
        pass
    return 64 * 2**20


def _pick_row_tile(v, adj_bytes, adj_vmem_budget):
    """Largest multiple-of-32 divisor of v whose adjacency working set fits the budget.

    Working set per row: double-buffered HBM blocks + one in-kernel bf16 cast copy.
    """
    per_row = v * (2 * adj_bytes + 2)
    cap = max(32, adj_vmem_budget // max(per_row, 1))
    if v <= cap:
        return v
    for step in (32, 16, 8):                      # prefer int8/bf16-friendly packing
        tv = (min(cap, v) // step) * step
        while tv >= step:
            if v % tv == 0:
                return tv
            tv -= step
    # TODO(synk): pad/mask the row axis for awkward (e.g. prime) V instead of falling
    # back to a single full-height tile, which can blow the v7x 64 MiB VMEM.
    return v


def cut_loss(predictions, adj_matrix, *, row_tile=None, binary_adjacency=True):
    """predictions: (B, V, C), adj_matrix: (B, V, V) -> scalar loss (batch mean)."""
    B, V, C = predictions.shape
    assert adj_matrix.shape == (B, V, V)

    preds_f32 = predictions.astype(jnp.float32)

    # The kernel is HBM-bound on the adjacency stream (~C flops/byte), so use the
    # narrowest dtype that is exact: int8 for 0/1 edges, bf16 otherwise.
    # TODO(synk): bf16 is still lossy for general weighted adjacency; keep f32 there.
    adj = adj_matrix.astype(jnp.int8 if binary_adjacency else jnp.bfloat16)
    adj_bytes = adj.dtype.itemsize

    vmem_cap = _vmem_capacity_bytes()
    if row_tile is None:
        # Leave ~half of VMEM for logits/probs/accumulator buffers + compiler scratch.
        row_tile = _pick_row_tile(V, adj_bytes, vmem_cap // 2)
    assert V % row_tile == 0, "vertex count must be divisible by row_tile"
    num_row_tiles = V // row_tile

    # VMEM working-set estimate for the declared limit (with headroom).
    est = (2 * row_tile * V * adj_bytes     # adjacency HBM blocks (double-buffered)
           + row_tile * V * 2               # in-kernel bf16 adjacency copy
           + 2 * V * C * 4                  # logits blocks (double-buffered)
           + V * C * (4 + 2)                # probs scratch (f32 + bf16)
           + row_tile * C * (4 + 4)         # matmul output + accumulator
           + 2 * C * 4                      # output block
           + (64 << 10))                    # slack
    vmem_limit = int(min(max(2 * est, 32 << 20), vmem_cap - (8 << 20)))

    kernel = functools.partial(_cut_loss_kernel, row_tile=row_tile)

    per_batch = pl.pallas_call(
        kernel,
        out_shape=jax.ShapeDtypeStruct((B, 1, C), jnp.float32),
        grid=(B, num_row_tiles),
        in_specs=[
            pl.BlockSpec((1, V, C), lambda b, i: (b, 0, 0)),          # logits
            pl.BlockSpec((1, row_tile, V), lambda b, i: (b, i, 0)),   # adj row-tile
        ],
        out_specs=pl.BlockSpec((1, 1, C), lambda b, i: (b, 0, 0)),
        scratch_shapes=[
            pltpu.VMEM((V, C), jnp.float32),        # exact probs (resident per batch)
            pltpu.VMEM((V, C), jnp.bfloat16),       # bf16 probs (MXU RHS, no re-cast)
            pltpu.VMEM((row_tile, C), jnp.float32),  # elementwise partial accumulator
        ],
        compiler_params=pltpu.CompilerParams(
            dimension_semantics=("parallel", "arbitrary"),
            vmem_limit_bytes=vmem_limit),
    )(preds_f32, adj)

    # Lane reduce + batch mean: trivial JAX glue on a (B, 1, C) array.
    return jnp.sum(per_batch) / B


def _reference(predictions, adj_matrix):
    probs = jax.nn.softmax(predictions.astype(jnp.float32), axis=-1)
    same = jnp.einsum("bvc,buc->bvu", probs, probs, precision="highest")
    return jnp.mean(jnp.sum(adj_matrix.astype(jnp.float32) * same, axis=(1, 2)))


if __name__ == "__main__":
    key = jax.random.PRNGKey(0)
    k1, k2 = jax.random.split(key)

    # batch, vertex_count (seq_len), color_count (embed_size)
    B, V, C = 2, 128, 32

    predictions = jax.random.normal(k1, (B, V, C), dtype=jnp.float32)

    # symmetric 0/1 adjacency with empty diagonal
    raw = jax.random.uniform(k2, (B, V, V))
    adj = (raw + jnp.swapaxes(raw, 1, 2) > 1.0).astype(jnp.float32)
    adj = adj * (1.0 - jnp.eye(V, dtype=jnp.float32))

    # row_tile=64 -> two reduction steps per batch, exercising the accumulator path.
    loss = cut_loss(predictions, adj, row_tile=64)
    jax.block_until_ready(loss)

    ref = _reference(predictions, adj)
    # Tolerance accounts for the bf16 MXU path (probs rounded to bf16 on the RHS);
    # accumulation is f32 throughout.
    assert jnp.allclose(loss, ref, rtol=5e-3, atol=1e-3), (loss, ref)

    print("KERNEL_OK")
</pallas_src>

<mosaic_0001>
module attributes {stable_mosaic.version = 11 : i64} {
  func.func @_cut_loss_kernel(%arg0: i32, %arg1: i32, %arg2: memref<1x128x32xf32, #tpu.memory_space<vmem>>, %arg3: memref<1x64x128xi8, #tpu.memory_space<vmem>>, %arg4: memref<1x1x32xf32, #tpu.memory_space<vmem>>, %arg5: memref<128x32xf32, #tpu.memory_space<vmem>>, %arg6: memref<128x32xbf16, #tpu.memory_space<vmem>>, %arg7: memref<64x32xf32, #tpu.memory_space<vmem>>) attributes {dimension_semantics = [#tpu.dimension_semantics<parallel>, #tpu.dimension_semantics<arbitrary>], iteration_bounds = array<i64: 2, 2>, scalar_prefetch = 0 : i64, scratch_operands = 3 : i64, tpu.core_type = #tpu.core_type<tc>, window_params = [{transform_indices = @transform_0, window_bounds = array<i64: 1, 128, 32>}, {transform_indices = @transform_1, window_bounds = array<i64: 1, 64, 128>}, {transform_indices = @transform_2, window_bounds = array<i64: 1, 1, 32>}]} {
    %c0_i32 = arith.constant 0 : i32
    %0 = arith.cmpi eq, %arg1, %c0_i32 : i32
    %1 = arith.extui %0 : i1 to i32
    %c0_i32_0 = arith.constant 0 : i32
    %2 = arith.cmpi ne, %1, %c0_i32_0 : i32
    scf.if %2 {
      %c0_11 = arith.constant 0 : index
      %c0_12 = arith.constant 0 : index
      %c0_13 = arith.constant 0 : index
      %19 = vector.load %arg2[%c0_11, %c0_12, %c0_13] : memref<1x128x32xf32, #tpu.memory_space<vmem>>, vector<1x128x32xf32>
      %20 = vector.shape_cast %19 : vector<1x128x32xf32> to vector<128x32xf32>
      %cst_14 = arith.constant dense<0xFF800000> : vector<128xf32>
      %21 = vector.multi_reduction <maximumf>, %20, %cst_14 [1] : vector<128x32xf32> to vector<128xf32>
      %22 = vector.shape_cast %21 : vector<128xf32> to vector<128x1xf32>
      %23 = vector.broadcast %22 : vector<128x1xf32> to vector<128x32xf32>
      %24 = arith.subf %20, %23 : vector<128x32xf32>
      %25 = math.exp %24 : vector<128x32xf32>
      %cst_15 = arith.constant dense<0.000000e+00> : vector<128xf32>
      %26 = vector.multi_reduction <add>, %25, %cst_15 [1] : vector<128x32xf32> to vector<128xf32>
      %27 = vector.shape_cast %26 : vector<128xf32> to vector<128x1xf32>
      %28 = vector.broadcast %27 : vector<128x1xf32> to vector<128x32xf32>
      %29 = arith.divf %25, %28 : vector<128x32xf32>
      %c0_16 = arith.constant 0 : index
      %c0_17 = arith.constant 0 : index
      %30 = vector.load %arg5[%c0_16, %c0_17] : memref<128x32xf32, #tpu.memory_space<vmem>>, vector<128x32xf32>
      tpu.vector_store %arg5[%c0_16, %c0_17], %29 {strides = array<i32>} : memref<128x32xf32, #tpu.memory_space<vmem>>, vector<128x32xf32>,
      %31 = arith.truncf %29 : vector<128x32xf32> to vector<128x32xbf16>
      %c0_18 = arith.constant 0 : index
      %c0_19 = arith.constant 0 : index
      %32 = vector.load %arg6[%c0_18, %c0_19] : memref<128x32xbf16, #tpu.memory_space<vmem>>, vector<128x32xbf16>
      tpu.vector_store %arg6[%c0_18, %c0_19], %31 {strides = array<i32>} : memref<128x32xbf16, #tpu.memory_space<vmem>>, vector<128x32xbf16>,
      %cst_20 = arith.constant 0.000000e+00 : f32
      %33 = vector.broadcast %cst_20 : f32 to vector<64x32xf32>
      %c0_21 = arith.constant 0 : index
      %c0_22 = arith.constant 0 : index
      %34 = vector.load %arg7[%c0_21, %c0_22] : memref<64x32xf32, #tpu.memory_space<vmem>>, vector<64x32xf32>
      tpu.vector_store %arg7[%c0_21, %c0_22], %33 {strides = array<i32>} : memref<64x32xf32, #tpu.memory_space<vmem>>, vector<64x32xf32>,
    } else {
    }
    %c0 = arith.constant 0 : index
    %c0_1 = arith.constant 0 : index
    %c0_2 = arith.constant 0 : index
    %3 = vector.load %arg3[%c0, %c0_1, %c0_2] : memref<1x64x128xi8, #tpu.memory_space<vmem>>, vector<1x64x128xi8>
    %4 = vector.shape_cast %3 : vector<1x64x128xi8> to vector<64x128xi8>
    %5 = arith.sitofp %4 : vector<64x128xi8> to vector<64x128xbf16>
    %c0_3 = arith.constant 0 : index
    %c0_4 = arith.constant 0 : index
    %6 = vector.load %arg6[%c0_3, %c0_4] : memref<128x32xbf16, #tpu.memory_space<vmem>>, vector<128x32xbf16>
    %cst = arith.constant dense<0.000000e+00> : vector<64x32xf32>
    %7 = tpu.matmul %5, %6, %cst {dimension_numbers = #tpu.dot_dimension_numbers<[1], [0], [0], [1], [0, 0, 1, 1], [], []>} : vector<64x128xbf16>, vector<128x32xbf16>, vector<64x32xf32> -> vector<64x32xf32>
    %c64_i32 = arith.constant 64 : i32
    %8 = arith.muli %arg1, %c64_i32 : i32
    %9 = tpu.assume_multiple %8, 64 : i32
    %10 = arith.index_cast %9 : i32 to index
    %c0_5 = arith.constant 0 : index
    %11 = vector.load %arg5[%10, %c0_5] : memref<128x32xf32, #tpu.memory_space<vmem>>, vector<64x32xf32>
    %c0_6 = arith.constant 0 : index
    %c0_7 = arith.constant 0 : index
    %12 = vector.load %arg7[%c0_6, %c0_7] : memref<64x32xf32, #tpu.memory_space<vmem>>, vector<64x32xf32>
    %13 = arith.mulf %11, %7 : vector<64x32xf32>
    %14 = arith.addf %12, %13 : vector<64x32xf32>
    %c0_8 = arith.constant 0 : index
    %c0_9 = arith.constant 0 : index
    %15 = vector.load %arg7[%c0_8, %c0_9] : memref<64x32xf32, #tpu.memory_space<vmem>>, vector<64x32xf32>
    tpu.vector_store %arg7[%c0_8, %c0_9], %14 {strides = array<i32>} : memref<64x32xf32, #tpu.memory_space<vmem>>, vector<64x32xf32>,
    %c1_i32 = arith.constant 1 : i32
    %16 = arith.cmpi eq, %arg1, %c1_i32 : i32
    %17 = arith.extui %16 : i1 to i32
    %c0_i32_10 = arith.constant 0 : i32
    %18 = arith.cmpi ne, %17, %c0_i32_10 : i32
    scf.if %18 {
      %c0_11 = arith.constant 0 : index
      %c0_12 = arith.constant 0 : index
      %19 = vector.load %arg7[%c0_11, %c0_12] : memref<64x32xf32, #tpu.memory_space<vmem>>, vector<64x32xf32>
      %cst_13 = arith.constant dense<0.000000e+00> : vector<32xf32>
      %20 = vector.multi_reduction <add>, %19, %cst_13 [0] : vector<64x32xf32> to vector<32xf32>
      %21 = vector.shape_cast %20 : vector<32xf32> to vector<1x1x32xf32>
      %c0_14 = arith.constant 0 : index
      %c0_15 = arith.constant 0 : index
      %c0_16 = arith.constant 0 : index
      %22 = vector.load %arg4[%c0_14, %c0_15, %c0_16] : memref<1x1x32xf32, #tpu.memory_space<vmem>>, vector<1x1x32xf32>
      tpu.vector_store %arg4[%c0_14, %c0_15, %c0_16], %21 {strides = array<i32>} : memref<1x1x32xf32, #tpu.memory_space<vmem>>, vector<1x1x32xf32>,
    } else {
    }
    return
  }
  func.func @transform_0(%arg0: i32, %arg1: i32) -> (i32, i32, i32) {
    %c0_i32 = arith.constant 0 : i32
    %c0_i32_0 = arith.constant 0 : i32
    %c0_i32_1 = arith.constant 0 : i32
    return %arg0, %c0_i32, %c0_i32_0 : i32, i32, i32
  }
  func.func @transform_1(%arg0: i32, %arg1: i32) -> (i32, i32, i32) {
    %c0_i32 = arith.constant 0 : i32
    %c0_i32_0 = arith.constant 0 : i32
    return %arg0, %arg1, %c0_i32 : i32, i32, i32
  }
  func.func @transform_2(%arg0: i32, %arg1: i32) -> (i32, i32, i32) {
    %c0_i32 = arith.constant 0 : i32
    %c0_i32_0 = arith.constant 0 : i32
    %c0_i32_1 = arith.constant 0 : i32
    return %arg0, %c0_i32, %c0_i32_0 : i32, i32, i32
  }
}

</mosaic_0001>

<llo_original>
// kernel: tpu_custom_call.1
$region0: #{tpu_custom_call.1}
  #allocation0 [shape = 'u32[]', space=smem, size = 0x4, offset = 0x4, fixed_abs, tag = 'smem constant byte address 0x4 - core index']
  #allocation1 [shape = 'u32[144,128]{1,0:T(1,128)}', space=vmem, size = 0x12000, scoped, tag = 'internal scratch']
  #allocation2 [shape = 'f32[128,32]{1,0:T(8,128)}', space=vmem, size = 0x10000, scoped, tag = 'scratch operand']
  #allocation3 [shape = 'bf16[128,32]{1,0:T(16,128)(2,1)}', space=vmem, size = 0x8000, scoped, tag = 'scratch operand']
  #allocation4 [shape = 'f32[64,32]{1,0:T(8,128)}', space=vmem, size = 0x8000, scoped, tag = 'scratch operand']
  %s0 = inlined_call_operand.vmem [shape: f32[2,128,32], index: 0, kind: input, shape index: {}]
  %s1 = inlined_call_operand.vmem [shape: s8[2,128,128], index: 1, kind: input, shape index: {}]
  %s2 = inlined_call_operand.hbm [shape: f32[2,1,32], index: 2, kind: output, shape index: {}]
  %s3 = sld [smem:[#allocation0]]
  $region49: #{tpu_custom_call.1} parent=0
    _
  %s5 = ssub.s32 1, %s3
  %s6 = scalar_select 0, %s5, %s3
  $region1: #{tpu_custom_call.1} parent=0
    #allocation5 [shape = 'u8[1024]{0}', space=vmem, size = 0x400, scoped, tag = 'output window, operand 0']
    #allocation6 [shape = 's32[2]{0}', space=sflag, size = 0x8, scoped, tag = 'scoped memory for tpu_custom_call.1']
    %7 = vsyncpa [#allocation6], 0
    %s8 = scalar_lea.sflag [#allocation6], 1
    %9 = vsyncpa %s8, 0
    loop: start=0, step=1, limit=6
    $region2: #{tpu_custom_call.1} parent=1 // loop_pre_header
      _
    $region3: #{tpu_custom_call.1} parent=1 // loop_header
      %s11 = sphi 0, %s15
      %p12 = scmp.ge.s32.totalorder %s11, 6
      %s18 = sphi 0, %s30
      %s19 = sphi 0, %s26
      %s20 = sphi 0, %s18
      %s21 = sphi 0, %s19
      %s22 = sphi 0, %s20
      %s23 = sphi 0, %s21
      %s33 = sphi 0, %s35
      %s36 = sphi 0, %s33
      %s37 = sphi 0, %s36
      %s53 = sphi 0, %s37
      %s61 = sphi 0, %s63
      %s64 = sphi 0, %s61
      %s65 = sphi 0, %s64
      %s81 = sphi 0, %s65
      %s87 = sphi 0, %s89
      %s90 = sphi 0, %s87
      %s91 = sphi 0, %s90
      %s107 = sphi 0, %s91
    $region4: #{tpu_custom_call.1} parent=1 // loop_header_branch
      %14 = sbr.rel (%p12) target = $region8
    $region5: #{tpu_custom_call.1} parent=1 // loop_body
      %s16 = ssub.s32 %s11, 1
      %s17 = ssub.s32 %s11, 2
      %s24 = sadd.s32 1, %s19
      %p25 = scmp.ge.s32.totalorder %s24, 2
      %s26 = scalar_select %p25, 0, %s24
      %s27 = sadd.s32 1, %s18
      %s28 = scalar_select %p25, %s27, %s18
      %p29 = scmp.ge.s32.totalorder %s28, 2
      %s30 = scalar_select %p29, 0, %s28
      %s31 = ssub.s32 %s18, %s30
      %p32 = scmp.eq.s32.totalorder %s31, 0
      %s34 = sadd.s32 %s33, 1
      %s35 = scalar_select %p32, %s33, %s34
      %p38 = pneg %p32
      %p39 = scmp.eq.s32.totalorder %s11, 3
      %p40 = por %p38, %p39
      %p41 = scmp.ne.s32.totalorder %s33, %s36
      %p42 = scmp.eq.s32.totalorder %s11, 0
      %p43 = por %p41, %p42
      %p44 = scmp.ne.s32.totalorder %s33, %s36
      %p45 = scmp.eq.s32.totalorder %s16, 3
      %p46 = por %p44, %p45
      %p47 = scmp.ne.s32.totalorder %s36, %s37
      %p48 = scmp.eq.s32.totalorder %s16, 0
      %p49 = por %p47, %p48
      %p50 = scmp.ne.s32.totalorder %s36, %s37
      %p51 = scmp.eq.s32.totalorder %s17, 3
      %p52 = por %p50, %p51
      %p54 = scmp.ne.s32.totalorder %s37, %s53
      %p55 = scmp.eq.s32.totalorder %s17, 0
      %p56 = por %p54, %p55
      %s57 = ssub.s32 %s18, %s30
      %s58 = ssub.s32 %s19, %s26
      %s59 = sor.u32 %s57, %s58
      %p60 = scmp.eq.s32.totalorder %s59, 0
      %s62 = sadd.s32 %s61, 1
      %s63 = scalar_select %p60, %s61, %s62
      %p66 = pneg %p60
      %p67 = scmp.eq.s32.totalorder %s11, 3
      %p68 = por %p66, %p67
      %p69 = scmp.ne.s32.totalorder %s61, %s64
      %p70 = scmp.eq.s32.totalorder %s11, 0
      %p71 = por %p69, %p70
      %p72 = scmp.ne.s32.totalorder %s61, %s64
      %p73 = scmp.eq.s32.totalorder %s16, 3
      %p74 = por %p72, %p73
      %p75 = scmp.ne.s32.totalorder %s64, %s65
      %p76 = scmp.eq.s32.totalorder %s16, 0
      %p77 = por %p75, %p76
      %p78 = scmp.ne.s32.totalorder %s64, %s65
      %p79 = scmp.eq.s32.totalorder %s17, 3
      %p80 = por %p78, %p79
      %p82 = scmp.ne.s32.totalorder %s65, %s81
      %p83 = scmp.eq.s32.totalorder %s17, 0
      %p84 = por %p82, %p83
      %s85 = ssub.s32 %s18, %s30
      %p86 = scmp.eq.s32.totalorder %s85, 0
      %s88 = sadd.s32 %s87, 1
      %s89 = scalar_select %p86, %s87, %s88
      %p92 = pneg %p86
      %p93 = scmp.eq.s32.totalorder %s11, 3
      %p94 = por %p92, %p93
      %p95 = scmp.ne.s32.totalorder %s87, %s90
      %p96 = scmp.eq.s32.totalorder %s11, 0
      %p97 = por %p95, %p96
      %p98 = scmp.ne.s32.totalorder %s87, %s90
      %p99 = scmp.eq.s32.totalorder %s16, 3
      %p100 = por %p98, %p99
      %p101 = scmp.ne.s32.totalorder %s90, %s91
      %p102 = scmp.eq.s32.totalorder %s16, 0
      %p103 = por %p101, %p102
      %p104 = scmp.ne.s32.totalorder %s90, %s91
      %p105 = scmp.eq.s32.totalorder %s17, 3
      %p106 = por %p104, %p105
      %p108 = scmp.ne.s32.totalorder %s91, %s107
      %p109 = scmp.eq.s32.totalorder %s17, 0
      %p110 = por %p108, %p109
      %p111 = scmp.le.s32.totalorder 1, %s11
      %p112 = scmp.lt.s32.totalorder %s11, 5
      %p113 = pnand %p111, %p112
      %p114 = pneg %p113
      // Predicated region
      $region9: #{tpu_custom_call.1} parent=5 // pred_check
        _
      $region10: #{tpu_custom_call.1} parent=5 // pred_check_branch
        %116 = sbr.rel (%p113) target = $region12
      $region11: #{tpu_custom_call.1} parent=5 // pred_region
        %s117 = ssub.s32 %s11, 1
      $region12: #{tpu_custom_call.1} parent=5 // pred_fallthru
        _
      %p118 = scmp.lt.s32.totalorder %s11, 4
      // Predicated region
      $region13: #{tpu_custom_call.1} parent=5 // pred_check
        %p119 = pneg %p118
      $region14: #{tpu_custom_call.1} parent=5 // pred_check_branch
        %121 = sbr.rel (%p119) target = $region16
      $region15: #{tpu_custom_call.1} parent=5 // pred_region
        // Predicated region
        $region17: #{tpu_custom_call.1} parent=15 // pred_check
          %p122 = pneg %p43
        $region18: #{tpu_custom_call.1} parent=15 // pred_check_branch
          %124 = sbr.rel (%p122) target = $region20
        $region19: #{tpu_custom_call.1} parent=15 // pred_region
          %p125 = scmp.lt.s32.totalorder %s18, 1
          %s126 = scalar_select %p125, %s18, 1
          %s127 = smul.addr %s126, 16
          %s128 = smul.addr %s127, 8
          %s129 = scalar_lea.vmem %s0, %s128
        $region20: #{tpu_custom_call.1} parent=15 // pred_fallthru
          _
        // Predicated region
        $region21: #{tpu_custom_call.1} parent=15 // pred_check
          %p130 = pneg %p71
        $region22: #{tpu_custom_call.1} parent=15 // pred_check_branch
          %132 = sbr.rel (%p130) target = $region24
        $region23: #{tpu_custom_call.1} parent=15 // pred_region
          %s133 = smul.u32 2, %s19
          %p134 = scmp.lt.s32.totalorder %s18, 1
          %s135 = scalar_select %p134, %s18, 1
          %p136 = scmp.lt.s32.totalorder %s133, 3
          %s137 = scalar_select %p136, %s133, 3
          %s138 = smul.addr %s135, 4
          %s139 = sadd.s32 %s137, %s138
          %s140 = smul.addr %s139, 8
          %s141 = scalar_lea.vmem %s1, %s140
          %s142 = smul.u32 2, %s19
        $region24: #{tpu_custom_call.1} parent=15 // pred_fallthru
          _
      $region16: #{tpu_custom_call.1} parent=5 // pred_fallthru
        _
      %p143 = scmp.le.s32.totalorder 1, %s11
      %p144 = scmp.lt.s32.totalorder %s11, 5
      %p145 = pnand %p143, %p144
      %p146 = pneg %p145
      // Predicated region
      $region25: #{tpu_custom_call.1} parent=5 // pred_check
        _
      $region26: #{tpu_custom_call.1} parent=5 // pred_check_branch
        %148 = sbr.rel (%p145) target = $region28
      $region27: #{tpu_custom_call.1} parent=5 // pred_region
        %s149 = ssub.s32 %s11, 1
        %p150 = scmp.lt.s32.totalorder %s20, 1
        %s151 = scalar_select %p150, %s20, 1
        %s152 = smul.addr %s151, 16
        %s153 = smul.addr %s152, 8
        %s154 = scalar_lea.vmem %s0, %s153
        %p155 = pneg %p49
        %p156 = pneg %p46
        %s157 = smul.u32 2, %s21
        %p158 = scmp.lt.s32.totalorder %s20, 1
        %s159 = scalar_select %p158, %s20, 1
        %p160 = scmp.lt.s32.totalorder %s157, 3
        %s161 = scalar_select %p160, %s157, 3
        %s162 = smul.addr %s159, 4
        %s163 = sadd.s32 %s161, %s162
        %s164 = smul.addr %s163, 8
        %s165 = scalar_lea.vmem %s1, %s164
        %p166 = pneg %p77
        %p167 = pneg %p74
        %p168 = pneg %p103
        %p169 = pneg %p100
        %s170 = sand.u32 %s90, 1
        %s171 = scalar_lea.sflag [#allocation6], %s170
        %s172 = sand.u32 %s90, 1
        %s173 = scalar_lea.vmem [#allocation5], %s172
        %p174 = scmp.lt.s32.totalorder %s20, 1
        %s175 = scalar_select %p174, %s20, 1
        %s176 = smul.addr %s175, 16
        %s177 = smul.addr %s176, 8
        %s178 = scalar_lea.vmem %s0, %s177
        %s179 = smul.u32 2, %s21
        %p180 = scmp.lt.s32.totalorder %s20, 1
        %s181 = scalar_select %p180, %s20, 1
        %p182 = scmp.lt.s32.totalorder %s179, 3
        %s183 = scalar_select %p182, %s179, 3
        %s184 = smul.addr %s181, 4
        %s185 = sadd.s32 %s183, %s184
        %s186 = smul.addr %s185, 8
        %s187 = scalar_lea.vmem %s1, %s186
        %s188 = smul.u32 2, %s21
        %p190 = scmp.eq.s32.totalorder %s21, 0
        // Predicated region
        $region29: #{tpu_custom_call.1} parent=27 // pred_check
          %p191 = pneg %p190
        $region30: #{tpu_custom_call.1} parent=27 // pred_check_branch
          %193 = sbr.rel (%p191) target = $region32
        $region31: #{tpu_custom_call.1} parent=27 // pred_region
          %v194 = vld [vmem:[%s178] sm:$0xff]
          %v195 = vld [vmem:[%s178 + $0x8] sm:$0xff]
          %v196 = vld [vmem:[%s178 + $0x10] sm:$0xff]
          %v197 = vld [vmem:[%s178 + $0x18] sm:$0xff]
          %v198 = vld [vmem:[%s178 + $0x20] sm:$0xff]
          %v199 = vld [vmem:[%s178 + $0x28] sm:$0xff]
          %v200 = vld [vmem:[%s178 + $0x30] sm:$0xff]
          %v201 = vld [vmem:[%s178 + $0x38] sm:$0xff]
          %v202 = vld [vmem:[%s178 + $0x40] sm:$0xff]
          %v203 = vld [vmem:[%s178 + $0x48] sm:$0xff]
          %v204 = vld [vmem:[%s178 + $0x50] sm:$0xff]
          %v205 = vld [vmem:[%s178 + $0x58] sm:$0xff]
          %v206 = vld [vmem:[%s178 + $0x60] sm:$0xff]
          %v207 = vld [vmem:[%s178 + $0x68] sm:$0xff]
          %v208 = vld [vmem:[%s178 + $0x70] sm:$0xff]
          %v209 = vld [vmem:[%s178 + $0x78] sm:$0xff]
          %vm210 = vcmask 261120
          %v211 = vsel %vm210, %v194, -inf
          %212 = vmax.xlane.f32.xlu0 %v211
          %v213 = vpop.xlane.xlu0 %212
          %v214 = vsel %vm210, %v195, -inf
          %215 = vmax.xlane.f32.xlu0 %v214
          %v216 = vpop.xlane.xlu0 %215
          %v217 = vsel %vm210, %v196, -inf
          %218 = vmax.xlane.f32.xlu0 %v217
          %v219 = vpop.xlane.xlu0 %218
          %v220 = vsel %vm210, %v197, -inf
          %221 = vmax.xlane.f32.xlu0 %v220
          %v222 = vpop.xlane.xlu0 %221
          %v223 = vsel %vm210, %v198, -inf
          %224 = vmax.xlane.f32.xlu0 %v223
          %v225 = vpop.xlane.xlu0 %224
          %v226 = vsel %vm210, %v199, -inf
          %227 = vmax.xlane.f32.xlu0 %v226
          %v228 = vpop.xlane.xlu0 %227
          %v229 = vsel %vm210, %v200, -inf
          %230 = vmax.xlane.f32.xlu0 %v229
          %v231 = vpop.xlane.xlu0 %230
          %v232 = vsel %vm210, %v201, -inf
          %233 = vmax.xlane.f32.xlu0 %v232
          %v234 = vpop.xlane.xlu0 %233
          %v235 = vsel %vm210, %v202, -inf
          %236 = vmax.xlane.f32.xlu0 %v235
          %v237 = vpop.xlane.xlu0 %236
          %v238 = vsel %vm210, %v203, -inf
          %239 = vmax.xlane.f32.xlu0 %v238
          %v240 = vpop.xlane.xlu0 %239
          %v241 = vsel %vm210, %v204, -inf
          %242 = vmax.xlane.f32.xlu0 %v241
          %v243 = vpop.xlane.xlu0 %242
          %v244 = vsel %vm210, %v205, -inf
          %245 = vmax.xlane.f32.xlu0 %v244
          %v246 = vpop.xlane.xlu0 %245
          %v247 = vsel %vm210, %v206, -inf
          %248 = vmax.xlane.f32.xlu0 %v247
          %v249 = vpop.xlane.xlu0 %248
          %v250 = vsel %vm210, %v207, -inf
          %251 = vmax.xlane.f32.xlu0 %v250
          %v252 = vpop.xlane.xlu0 %251
          %v253 = vsel %vm210, %v208, -inf
          %254 = vmax.xlane.f32.xlu0 %v253
          %v255 = vpop.xlane.xlu0 %254
          %v256 = vsel %vm210, %v209, -inf
          %257 = vmax.xlane.f32.xlu0 %v256
          %v258 = vpop.xlane.xlu0 %257
          %v259 = vsub.f32 %v194, %v213
          %v260 = vsub.f32 %v195, %v216
          %v261 = vsub.f32 %v196, %v219
          %v262 = vsub.f32 %v197, %v222
          %v263 = vsub.f32 %v198, %v225
          %v264 = vsub.f32 %v199, %v228
          %v265 = vsub.f32 %v200, %v231
          %v266 = vsub.f32 %v201, %v234
          %v267 = vsub.f32 %v202, %v237
          %v268 = vsub.f32 %v203, %v240
          %v269 = vsub.f32 %v204, %v243
          %v270 = vsub.f32 %v205, %v246
          %v271 = vsub.f32 %v206, %v249
          %v272 = vsub.f32 %v207, %v252
          %v273 = vsub.f32 %v208, %v255
          %v274 = vsub.f32 %v209, %v258
          %v275 = vmul.f32 %v259, 1.442695
          %v276 = vpow.pop %v275
          %v277 = vmul.f32 %v260, 1.442695
          %v278 = vpow.pop %v277
          %v279 = vmul.f32 %v261, 1.442695
          %v280 = vpow.pop %v279
          %v281 = vmul.f32 %v262, 1.442695
          %v282 = vpow.pop %v281
          %v283 = vmul.f32 %v263, 1.442695
          %v284 = vpow.pop %v283
          %v285 = vmul.f32 %v264, 1.442695
          %v286 = vpow.pop %v285
          %v287 = vmul.f32 %v265, 1.442695
          %v288 = vpow.pop %v287
          %v289 = vmul.f32 %v266, 1.442695
          %v290 = vpow.pop %v289
          %v291 = vmul.f32 %v267, 1.442695
          %v292 = vpow.pop %v291
          %v293 = vmul.f32 %v268, 1.442695
          %v294 = vpow.pop %v293
          %v295 = vmul.f32 %v269, 1.442695
          %v296 = vpow.pop %v295
          %v297 = vmul.f32 %v270, 1.442695
          %v298 = vpow.pop %v297
          %v299 = vmul.f32 %v271, 1.442695
          %v300 = vpow.pop %v299
          %v301 = vmul.f32 %v272, 1.442695
          %v302 = vpow.pop %v301
          %v303 = vmul.f32 %v273, 1.442695
          %v304 = vpow.pop %v303
          %v305 = vmul.f32 %v274, 1.442695
          %v306 = vpow.pop %v305
          %v307 = vsel %vm210, %v276, 0.0
          %308 = vadd.xlane.f32.xlu0 %v307
          %v309 = vpop.xlane.xlu0 %308
          %v310 = vsel %vm210, %v278, 0.0
          %311 = vadd.xlane.f32.xlu0 %v310
          %v312 = vpop.xlane.xlu0 %311
          %v313 = vsel %vm210, %v280, 0.0
          %314 = vadd.xlane.f32.xlu0 %v313
          %v315 = vpop.xlane.xlu0 %314
          %v316 = vsel %vm210, %v282, 0.0
          %317 = vadd.xlane.f32.xlu0 %v316
          %v318 = vpop.xlane.xlu0 %317
          %v319 = vsel %vm210, %v284, 0.0
          %320 = vadd.xlane.f32.xlu0 %v319
          %v321 = vpop.xlane.xlu0 %320
          %v322 = vsel %vm210, %v286, 0.0
          %323 = vadd.xlane.f32.xlu0 %v322
          %v324 = vpop.xlane.xlu0 %323
          %v325 = vsel %vm210, %v288, 0.0
          %326 = vadd.xlane.f32.xlu0 %v325
          %v327 = vpop.xlane.xlu0 %326
          %v328 = vsel %vm210, %v290, 0.0
          %329 = vadd.xlane.f32.xlu0 %v328
          %v330 = vpop.xlane.xlu0 %329
          %v331 = vsel %vm210, %v292, 0.0
          %332 = vadd.xlane.f32.xlu0 %v331
          %v333 = vpop.xlane.xlu0 %332
          %v334 = vsel %vm210, %v294, 0.0
          %335 = vadd.xlane.f32.xlu0 %v334
          %v336 = vpop.xlane.xlu0 %335
          %v337 = vsel %vm210, %v296, 0.0
          %338 = vadd.xlane.f32.xlu0 %v337
          %v339 = vpop.xlane.xlu0 %338
          %v340 = vsel %vm210, %v298, 0.0
          %341 = vadd.xlane.f32.xlu0 %v340
          %v342 = vpop.xlane.xlu0 %341
          %v343 = vsel %vm210, %v300, 0.0
          %344 = vadd.xlane.f32.xlu0 %v343
          %v345 = vpop.xlane.xlu0 %344
          %v346 = vsel %vm210, %v302, 0.0
          %347 = vadd.xlane.f32.xlu0 %v346
          %v348 = vpop.xlane.xlu0 %347
          %v349 = vsel %vm210, %v304, 0.0
          %350 = vadd.xlane.f32.xlu0 %v349
          %v351 = vpop.xlane.xlu0 %350
          %v352 = vsel %vm210, %v306, 0.0
          %353 = vadd.xlane.f32.xlu0 %v352
          %v354 = vpop.xlane.xlu0 %353
          %v355 = vrcp.pop %v309
          %v356 = vmul.f32 %v276, %v355
          %v357 = vrcp.pop %v312
          %v358 = vmul.f32 %v278, %v357
          %v359 = vrcp.pop %v315
          %v360 = vmul.f32 %v280, %v359
          %v361 = vrcp.pop %v318
          %v362 = vmul.f32 %v282, %v361
          %v363 = vrcp.pop %v321
          %v364 = vmul.f32 %v284, %v363
          %v365 = vrcp.pop %v324
          %v366 = vmul.f32 %v286, %v365
          %v367 = vrcp.pop %v327
          %v368 = vmul.f32 %v288, %v367
          %v369 = vrcp.pop %v330
          %v370 = vmul.f32 %v290, %v369
          %v371 = vrcp.pop %v333
          %v372 = vmul.f32 %v292, %v371
          %v373 = vrcp.pop %v336
          %v374 = vmul.f32 %v294, %v373
          %v375 = vrcp.pop %v339
          %v376 = vmul.f32 %v296, %v375
          %v377 = vrcp.pop %v342
          %v378 = vmul.f32 %v298, %v377
          %v379 = vrcp.pop %v345
          %v380 = vmul.f32 %v300, %v379
          %v381 = vrcp.pop %v348
          %v382 = vmul.f32 %v302, %v381
          %v383 = vrcp.pop %v351
          %v384 = vmul.f32 %v304, %v383
          %v385 = vrcp.pop %v354
          %v386 = vmul.f32 %v306, %v385
          %387 = vst.msk [vmem:[#allocation2] sm:$0xff] %vm210, %v356
          %388 = vst.msk [vmem:[#allocation2 + $0x8] sm:$0xff] %vm210, %v358
          %389 = vst.msk [vmem:[#allocation2 + $0x10] sm:$0xff] %vm210, %v360
          %390 = vst.msk [vmem:[#allocation2 + $0x18] sm:$0xff] %vm210, %v362
          %391 = vst.msk [vmem:[#allocation2 + $0x20] sm:$0xff] %vm210, %v364
          %392 = vst.msk [vmem:[#allocation2 + $0x28] sm:$0xff] %vm210, %v366
          %393 = vst.msk [vmem:[#allocation2 + $0x30] sm:$0xff] %vm210, %v368
          %394 = vst.msk [vmem:[#allocation2 + $0x38] sm:$0xff] %vm210, %v370
          %395 = vst.msk [vmem:[#allocation2 + $0x40] sm:$0xff] %vm210, %v372
          %396 = vst.msk [vmem:[#allocation2 + $0x48] sm:$0xff] %vm210, %v374
          %397 = vst.msk [vmem:[#allocation2 + $0x50] sm:$0xff] %vm210, %v376
          %398 = vst.msk [vmem:[#allocation2 + $0x58] sm:$0xff] %vm210, %v378
          %399 = vst.msk [vmem:[#allocation2 + $0x60] sm:$0xff] %vm210, %v380
          %400 = vst.msk [vmem:[#allocation2 + $0x68] sm:$0xff] %vm210, %v382
          %401 = vst.msk [vmem:[#allocation2 + $0x70] sm:$0xff] %vm210, %v384
          %402 = vst.msk [vmem:[#allocation2 + $0x78] sm:$0xff] %vm210, %v386
          %v403 = vpack.c.bf16 %v358, %v356
          %v404 = vpack.c.bf16 %v362, %v360
          %v405 = vpack.c.bf16 %v366, %v364
          %v406 = vpack.c.bf16 %v370, %v368
          %v407 = vpack.c.bf16 %v374, %v372
          %v408 = vpack.c.bf16 %v378, %v376
          %v409 = vpack.c.bf16 %v382, %v380
          %v410 = vpack.c.bf16 %v386, %v384
          %411 = vst.msk [vmem:[#allocation3] sm:$0xff] %vm210, %v403
          %412 = vst.msk [vmem:[#allocation3 + $0x8] sm:$0xff] %vm210, %v404
          %413 = vst.msk [vmem:[#allocation3 + $0x10] sm:$0xff] %vm210, %v405
          %414 = vst.msk [vmem:[#allocation3 + $0x18] sm:$0xff] %vm210, %v406
          %415 = vst.msk [vmem:[#allocation3 + $0x20] sm:$0xff] %vm210, %v407
          %416 = vst.msk [vmem:[#allocation3 + $0x28] sm:$0xff] %vm210, %v408
          %417 = vst.msk [vmem:[#allocation3 + $0x30] sm:$0xff] %vm210, %v409
          %418 = vst.msk [vmem:[#allocation3 + $0x38] sm:$0xff] %vm210, %v410
          %419 = vst.msk [vmem:[#allocation4] sm:$0xff] %vm210, 0.0
          %420 = vst.msk [vmem:[#allocation4 + $0x8] sm:$0xff] %vm210, 0.0
          %421 = vst.msk [vmem:[#allocation4 + $0x10] sm:$0xff] %vm210, 0.0
          %422 = vst.msk [vmem:[#allocation4 + $0x18] sm:$0xff] %vm210, 0.0
          %423 = vst.msk [vmem:[#allocation4 + $0x20] sm:$0xff] %vm210, 0.0
          %424 = vst.msk [vmem:[#allocation4 + $0x28] sm:$0xff] %vm210, 0.0
          %425 = vst.msk [vmem:[#allocation4 + $0x30] sm:$0xff] %vm210, 0.0
          %426 = vst.msk [vmem:[#allocation4 + $0x38] sm:$0xff] %vm210, 0.0
        $region32: #{tpu_custom_call.1} parent=27 // pred_fallthru
          _
        %v427 = vld [vmem:[%s187] sm:$0xff]
        %v428 = vld [vmem:[%s187 + $0x8] sm:$0xff]
        %v429 = vunpack.c.l.s8.bf16 %v427
        %v430 = vunpack.c.h.s8.bf16 %v427
        %v431 = vunpack.c.l.s8.bf16 %v428
        %v432 = vunpack.c.h.s8.bf16 %v428
        %v433 = vld [vmem:[#allocation3] sm:$0xff]
        %v434 = vld [vmem:[#allocation3 + $0x8] sm:$0xff]
        %v435 = vld [vmem:[#allocation3 + $0x10] sm:$0xff]
        %v436 = vld [vmem:[#allocation3 + $0x18] sm:$0xff]
        %v437 = vld [vmem:[#allocation3 + $0x20] sm:$0xff]
        %v438 = vld [vmem:[#allocation3 + $0x28] sm:$0xff]
        %v439 = vld [vmem:[#allocation3 + $0x30] sm:$0xff]
        %v440 = vld [vmem:[#allocation3 + $0x38] sm:$0xff]
        %441 = vmatprep.subr.bf16.mxu0 0
        %442 = vmatpush1.bf16.msra.mxu0 %v433
        %443 = vmatprep.subr.bf16.mxu0 0
        %444 = vmatpush1.bf16.msra.mxu0 %v434
        %445 = vmatprep.subr.bf16.mxu0 0
        %446 = vmatpush1.bf16.msra.mxu0 %v435
        %447 = vmatprep.subr.bf16.mxu0 0
        %448 = vmatpush1.bf16.msra.mxu0 %v436
        %449 = vmatprep.subr.bf16.mxu0 0
        %450 = vmatpush1.bf16.msra.mxu0 %v437
        %451 = vmatprep.subr.bf16.mxu0 0
        %452 = vmatpush1.bf16.msra.mxu0 %v438
        %453 = vmatprep.subr.bf16.mxu0 0
        %454 = vmatpush1.bf16.msra.mxu0 %v439
        %455 = vmatprep.subr.bf16.mxu0 0
        %456 = vmatpush1.bf16.msra.mxu0 %v440
        %457 = vmatprep.subr.bf16.mxu0 0
        %458 = vmatpush1.bf16.msra.mxu0 0
        %459 = vmatprep.subr.bf16.mxu0 0
        %460 = vmatpush1.bf16.msra.mxu0 0
        %461 = vmatprep.subr.bf16.mxu0 0
        %462 = vmatpush1.bf16.msra.mxu0 0
        %463 = vmatprep.subr.bf16.mxu0 0
        %464 = vmatpush1.bf16.msra.mxu0 0
        %465 = vmatprep.subr.bf16.mxu0 0
        %466 = vmatpush1.bf16.msra.mxu0 0
        %467 = vmatprep.subr.bf16.mxu0 0
        %468 = vmatpush1.bf16.msra.mxu0 0
        %469 = vmatprep.subr.bf16.mxu0 0
        %470 = vmatpush1.bf16.msra.mxu0 0
        %471 = vmatprep.subr.bf16.mxu0 0
        %472 = vmatpush1.bf16.msra.mxu0 0
        %473 = vmatprep.mubr.bf16.mxu0 0
        %474 = vmatmul.mubr.bf16.gmra.mrb[0].mxu0 %v429
        %v475 = vpop.f32.mrb[0].mxu0
        %v476 = vadd.f32 0.0, %v475
        %v477 = vpop.f32.mrb[0].mxu0
        %v478 = vpop.f32.mrb[0].mxu0
        %v479 = vadd.f32 0.0, %v478
        %v480 = vpop.f32.mrb[0].mxu0
        %481 = vmatprep.mubr.bf16.mxu0 0
        %482 = vmatmul.mubr.bf16.gmra.mrb[0].mxu0 %v430
        %v483 = vpop.f32.mrb[0].mxu0
        %v484 = vadd.f32 0.0, %v483
        %v485 = vpop.f32.mrb[0].mxu0
        %v486 = vpop.f32.mrb[0].mxu0
        %v487 = vadd.f32 0.0, %v486
        %v488 = vpop.f32.mrb[0].mxu0
        %489 = vmatprep.mubr.bf16.mxu0 0
        %490 = vmatmul.mubr.bf16.gmra.mrb[0].mxu0 %v431
        %v491 = vpop.f32.mrb[0].mxu0
        %v492 = vadd.f32 0.0, %v491
        %v493 = vpop.f32.mrb[0].mxu0
        %v494 = vpop.f32.mrb[0].mxu0
        %v495 = vadd.f32 0.0, %v494
        %v496 = vpop.f32.mrb[0].mxu0
        %497 = vmatprep.mubr.bf16.mxu0 0
        %498 = vmatmul.mubr.bf16.gmra.mrb[0].mxu0 %v432
        %v499 = vpop.f32.mrb[0].mxu0
        %v500 = vadd.f32 0.0, %v499
        %v501 = vpop.f32.mrb[0].mxu0
        %v502 = vpop.f32.mrb[0].mxu0
        %v503 = vadd.f32 0.0, %v502
        %v504 = vpop.f32.mrb[0].mxu0
        %505 = vdwg.mxu0
        %s506 = smul.u32 %s21, 64
        %s507 = scalar_lea.vmem [#allocation2], %s506
        %v508 = vld [vmem:[%s507] sm:$0xff]
        %v509 = vld [vmem:[%s507 + $0x8] sm:$0xff]
        %v510 = vld [vmem:[%s507 + $0x10] sm:$0xff]
        %v511 = vld [vmem:[%s507 + $0x18] sm:$0xff]
        %v512 = vld [vmem:[%s507 + $0x20] sm:$0xff]
        %v513 = vld [vmem:[%s507 + $0x28] sm:$0xff]
        %v514 = vld [vmem:[%s507 + $0x30] sm:$0xff]
        %v515 = vld [vmem:[%s507 + $0x38] sm:$0xff]
        %v516 = vld [vmem:[#allocation4] sm:$0xff]
        %v517 = vld [vmem:[#allocation4 + $0x8] sm:$0xff]
        %v518 = vld [vmem:[#allocation4 + $0x10] sm:$0xff]
        %v519 = vld [vmem:[#allocation4 + $0x18] sm:$0xff]
        %v520 = vld [vmem:[#allocation4 + $0x20] sm:$0xff]
        %v521 = vld [vmem:[#allocation4 + $0x28] sm:$0xff]
        %v522 = vld [vmem:[#allocation4 + $0x30] sm:$0xff]
        %v523 = vld [vmem:[#allocation4 + $0x38] sm:$0xff]
        %v524 = vmul.f32 %v508, %v476
        %v525 = vmul.f32 %v509, %v479
        %v526 = vmul.f32 %v510, %v484
        %v527 = vmul.f32 %v511, %v487
        %v528 = vmul.f32 %v512, %v492
        %v529 = vmul.f32 %v513, %v495
        %v530 = vmul.f32 %v514, %v500
        %v531 = vmul.f32 %v515, %v503
        %v532 = vadd.f32 %v516, %v524
        %v533 = vadd.f32 %v517, %v525
        %v534 = vadd.f32 %v518, %v526
        %v535 = vadd.f32 %v519, %v527
        %v536 = vadd.f32 %v520, %v528
        %v537 = vadd.f32 %v521, %v529
        %v538 = vadd.f32 %v522, %v530
        %v539 = vadd.f32 %v523, %v531
        %vm540 = vcmask 261120
        %541 = vst.msk [vmem:[#allocation4] sm:$0xff] %vm540, %v532
        %542 = vst.msk [vmem:[#allocation4 + $0x8] sm:$0xff] %vm540, %v533
        %543 = vst.msk [vmem:[#allocation4 + $0x10] sm:$0xff] %vm540, %v534
        %544 = vst.msk [vmem:[#allocation4 + $0x18] sm:$0xff] %vm540, %v535
        %545 = vst.msk [vmem:[#allocation4 + $0x20] sm:$0xff] %vm540, %v536
        %546 = vst.msk [vmem:[#allocation4 + $0x28] sm:$0xff] %vm540, %v537
        %547 = vst.msk [vmem:[#allocation4 + $0x30] sm:$0xff] %vm540, %v538
        %548 = vst.msk [vmem:[#allocation4 + $0x38] sm:$0xff] %vm540, %v539
        %p549 = scmp.eq.s32.totalorder %s21, 1
        // Predicated region
        $region33: #{tpu_custom_call.1} parent=27 // pred_check
          %p550 = pneg %p549
        $region34: #{tpu_custom_call.1} parent=27 // pred_check_branch
          %552 = sbr.rel (%p550) target = $region36
        $region35: #{tpu_custom_call.1} parent=27 // pred_region
          %v553 = vld [vmem:[#allocation4] sm:$0xff]
          %v554 = vld [vmem:[#allocation4 + $0x8] sm:$0xff]
          %v555 = vld [vmem:[#allocation4 + $0x10] sm:$0xff]
          %v556 = vld [vmem:[#allocation4 + $0x18] sm:$0xff]
          %v557 = vld [vmem:[#allocation4 + $0x20] sm:$0xff]
          %v558 = vld [vmem:[#allocation4 + $0x28] sm:$0xff]
          %v559 = vld [vmem:[#allocation4 + $0x30] sm:$0xff]
          %v560 = vld [vmem:[#allocation4 + $0x38] sm:$0xff]
          %v561 = vsel %vm540, %v553, 0.0
          %v562 = vsel %vm540, %v554, 0.0
          %v563 = vadd.f32 %v561, %v562
          %v564 = vsel %vm540, %v555, 0.0
          %v565 = vadd.f32 %v563, %v564
          %v566 = vsel %vm540, %v556, 0.0
          %v567 = vadd.f32 %v565, %v566
          %v568 = vsel %vm540, %v557, 0.0
          %v569 = vadd.f32 %v567, %v568
          %v570 = vsel %vm540, %v558, 0.0
          %v571 = vadd.f32 %v569, %v570
          %v572 = vsel %vm540, %v559, 0.0
          %v573 = vadd.f32 %v571, %v572
          %v574 = vsel %vm540, %v560, 0.0
          %v575 = vadd.f32 %v573, %v574
          %v576 = vrot.slane %v575, 4
          %v577 = vadd.f32 %v575, %v576
          %v578 = vrot.slane %v577, 2
          %v579 = vadd.f32 %v577, %v578
          %v580 = vrot.slane %v579, 1
          %v581 = vadd.f32 %v579, %v580
          %vm582 = vcmask 253952
          %583 = vst.msk [vmem:[%s173] sm:$0x1] %vm582, %v581
        $region36: #{tpu_custom_call.1} parent=27 // pred_fallthru
          _
        %s584 = sand.u32 %s90, 1
        %s585 = scalar_lea.sflag [#allocation6], %s584
        %s586 = sand.u32 %s90, 1
        %s587 = scalar_lea.vmem [#allocation5], %s586
        // Predicated region
        $region37: #{tpu_custom_call.1} parent=27 // pred_check
          %p588 = pneg %p100
        $region38: #{tpu_custom_call.1} parent=27 // pred_check_branch
          %590 = sbr.rel (%p588) target = $region40
        $region39: #{tpu_custom_call.1} parent=27 // pred_region
          %s592 = ssub.s32 16, 16
          %593 = vsyncadd %s585, %s592
          %s594 = smul.addr %s20, 16
          %s595 = scalar_lea.hbm %s2, %s594
          %s597 = sshll.u32 %s587, 4
          %s598 = int_to_ptr.vmem [resolvable:$true] %s597
          %600 = dma.vmem_to_hbm [thread:$0]  %s598, 16, %s595, %s585
        $region40: #{tpu_custom_call.1} parent=27 // pred_fallthru
          _
      $region28: #{tpu_custom_call.1} parent=5 // pred_fallthru
        _
      %p601 = scmp.le.s32.totalorder 2, %s11
      // Predicated region
      $region41: #{tpu_custom_call.1} parent=5 // pred_check
        %p602 = pneg %p601
      $region42: #{tpu_custom_call.1} parent=5 // pred_check_branch
        %604 = sbr.rel (%p602) target = $region44
      $region43: #{tpu_custom_call.1} parent=5 // pred_region
        %s605 = ssub.s32 %s11, 2
        // Predicated region
        $region45: #{tpu_custom_call.1} parent=43 // pred_check
          %p606 = pneg %p106
        $region46: #{tpu_custom_call.1} parent=43 // pred_check_branch
          %608 = sbr.rel (%p606) target = $region48
        $region47: #{tpu_custom_call.1} parent=43 // pred_region
          %s609 = sand.u32 %s91, 1
          %s610 = scalar_lea.sflag [#allocation6], %s609
          %s611 = sand.u32 %s91, 1
          %s612 = scalar_lea.vmem [#allocation5], %s611
          %613 = dma.done %s610, 16
        $region48: #{tpu_custom_call.1} parent=43 // pred_fallthru
          _
      $region44: #{tpu_custom_call.1} parent=5 // pred_fallthru
        _
    $region6: #{tpu_custom_call.1} parent=1 // loop_footer
      %s15 = sadd.s32 1, %s11
    $region7: #{tpu_custom_call.1} parent=1 // loop_footer_branch
      %10 = sbr.rel target = $region3
    $region8: #{tpu_custom_call.1} parent=1 // loop_exit
      _
    %614 = vsyncpa [#allocation6], 1
    %s615 = scalar_lea.sflag [#allocation6], 1
    %616 = vsyncpa %s615, 1

</llo_original>
